<compile_context>
chip_gen: v7x
topology: tpu7x:2x2x1
jax: 0.10.0
libtpu: 0.0.40
codegen_flags: <defaults>
</compile_context>

<pallas_src>
import jax
import jax.numpy as jnp
from jax.experimental import pallas as pl
from jax.experimental.pallas import tpu as pltpu


def _merger_kernel(w_ref, x_ref, o_ref):
    """One batch tile of the weighted head merge (head flattened into lanes).

    w_ref : [1, head*fea]   softmax(weight) over head axis (f32, precomputed once)
    x_ref : [TB, head*fea]  lane-dense batch tile of the input
    o_ref : [TB, fea]
    """
    fea = o_ref.shape[-1]
    head = x_ref.shape[-1] // fea

    # Per-head accumulation: static lane slices of the lane-dense tile, plain
    # VPU fma on [TB, fea] slabs.  Only one head-slab is upcast to f32 at a
    # time (no full-tile f32 copy); the [1, fea] weight row broadcasts along
    # sublanes inside the multiply.
    acc = x_ref[:, 0:fea].astype(jnp.float32) * w_ref[:, 0:fea]
    for h in range(1, head):  # head is small & static -> full unroll
        lo = h * fea
        acc = acc + x_ref[:, lo:lo + fea].astype(jnp.float32) * w_ref[:, lo:lo + fea]
    o_ref[...] = acc.astype(o_ref.dtype)


def _choose_batch_tile(bs, head, fea, itemsize):
    """Pick a batch tile (rows) for the flattened [bs, head*fea] input.

    Accounts for the double-buffered input/output tiles AND the f32
    intermediates (accumulator + one per-head upcast slab), stays well under
    the tightest scoped-VMEM budget across generations, and never collapses to
    a single grid step when the batch is splittable (pipelining + v7x
    megacore sharding).
    """
    budget_bytes = 12 * 1024 * 1024  # of the 32 MiB vmem_limit set below
    bytes_per_row = (
        2 * head * fea * itemsize    # x tile, double-buffered
        + 2 * fea * itemsize         # out tile, double-buffered
        + 2 * fea * 4                # f32 accumulator + per-head upcast slab
    )
    tb = budget_bytes // max(bytes_per_row, 1)
    tb = max(8, min(tb, 1024))       # 512-1024 rows amortize per-step overhead
    tb = (tb // 8) * 8               # sublane-aligned

    if bs >= 16:
        # Always keep >= 2 grid steps (>= 4 when bs >= 32) so input DMA,
        # compute and output DMA overlap and both v7x TensorCores get work.
        steps = 4 if bs >= 32 else 2
        cap = max(8, ((pl.cdiv(bs, steps) + 7) // 8) * 8)
        tb = min(tb, cap)
    else:
        # Tiny batch: single tile; block dims == full array dims is always legal.
        tb = min(tb, bs)
    return tb


def merger_forward(x, weight, head, *, batch_tile=None):
    """Pallas TPU forward of HAVE_SMAC Merger.

    x:      [bs, head, fea_dim]
    weight: [1, head, fea_dim] learnable mixing weights (ignored when head == 1)
    """
    if head == 1:
        # No reduction / softmax hot path; plain squeeze is pure glue.
        return jnp.squeeze(x, axis=1)

    bs, h, fea = x.shape
    assert h == head

    # Amortize the softmax: computed once on [1, head, fea] (negligible) and
    # DMA'd once (constant index_map keeps it resident across batch tiles).
    w_sm = jax.nn.softmax(weight.astype(jnp.float32), axis=1)

    # Flatten head into the lane axis: free contiguous reshapes, lane-dense
    # tiles, contiguous HBM->VMEM DMA, aligned per-head lane slices in-kernel.
    w_flat = w_sm.reshape(1, head * fea)
    x_flat = x.reshape(bs, head * fea)

    tb = batch_tile if batch_tile is not None else _choose_batch_tile(
        bs, head, fea, jnp.dtype(x.dtype).itemsize)
    grid = (pl.cdiv(bs, tb),)

    return pl.pallas_call(
        _merger_kernel,
        out_shape=jax.ShapeDtypeStruct((bs, fea), x.dtype),
        grid_spec=pltpu.PrefetchScalarGridSpec(
            num_scalar_prefetch=0,
            grid=grid,
            in_specs=[
                pl.BlockSpec((1, head * fea), lambda i: (0, 0)),    # w_sm (resident)
                pl.BlockSpec((tb, head * fea), lambda i: (i, 0)),   # x batch tile
            ],
            out_specs=pl.BlockSpec((tb, fea), lambda i: (i, 0)),
        ),
        compiler_params=pltpu.CompilerParams(
            # Batch tiles are independent -> shard across TCs (v7x megacore).
            dimension_semantics=("parallel",),
            # Generation-safe: <= v7x scoped default (64 MiB physical), raises
            # the 16 MiB default on v5e so large tiles never spill.
            vmem_limit_bytes=32 * 1024 * 1024,
        ),
    )(w_flat, x_flat)


if __name__ == "__main__":
    # Small shapes consistent with the module's forward: [bs, n_head, fea_dim]
    bs, head, fea_dim = 2, 4, 32

    key = jax.random.PRNGKey(0)
    x = jax.random.normal(key, (bs, head, fea_dim), dtype=jnp.float32)

    # Deterministic parameter init: module fills weight with 1.0
    weight = jnp.ones((1, head, fea_dim), dtype=jnp.float32)

    out = jax.block_until_ready(merger_forward(x, weight, head))
    ref = jnp.sum(jax.nn.softmax(weight, axis=1) * x, axis=1)
    assert out.shape == (bs, fea_dim)
    assert jnp.allclose(out, ref, atol=1e-5, rtol=1e-5), "mismatch vs reference"

    # Multi-tile path with explicit tile: several grid steps + ragged last tile
    # (40 = 16 + 16 + 8).
    bs2 = 40
    x2 = jax.random.normal(jax.random.PRNGKey(2), (bs2, head, fea_dim), dtype=jnp.float32)
    out2 = jax.block_until_ready(merger_forward(x2, weight, head, batch_tile=16))
    ref2 = jnp.sum(jax.nn.softmax(weight, axis=1) * x2, axis=1)
    assert out2.shape == (bs2, fea_dim)
    assert jnp.allclose(out2, ref2, atol=1e-5, rtol=1e-5), "tiled mismatch vs reference"

    # Auto-chooser path: bs >= 32 must give >= 4 grid steps (no pipeline collapse).
    bs3 = 64
    x3 = jax.random.normal(jax.random.PRNGKey(3), (bs3, head, fea_dim), dtype=jnp.bfloat16)
    out3 = jax.block_until_ready(merger_forward(x3, weight, head))
    ref3 = jnp.sum(jax.nn.softmax(weight, axis=1) * x3.astype(jnp.float32), axis=1)
    assert out3.shape == (bs3, fea_dim)
    assert jnp.allclose(out3.astype(jnp.float32), ref3, atol=2e-2, rtol=2e-2), \
        "bf16 auto-tiled mismatch vs reference"

    # head == 1 path
    x1 = jax.random.normal(jax.random.PRNGKey(1), (bs, 1, fea_dim), dtype=jnp.float32)
    out1 = jax.block_until_ready(merger_forward(x1, None, head=1))
    assert jnp.allclose(out1, jnp.squeeze(x1, axis=1))

    print("KERNEL_OK")
</pallas_src>

<mosaic_0001>
module attributes {stable_mosaic.version = 11 : i64} {
  func.func @_merger_kernel(%arg0: i32, %arg1: memref<1x128xf32, #tpu.memory_space<vmem>>, %arg2: memref<2x128xf32, #tpu.memory_space<vmem>>, %arg3: memref<2x32xf32, #tpu.memory_space<vmem>>) attributes {dimension_semantics = [#tpu.dimension_semantics<parallel>], iteration_bounds = array<i64: 1>, scalar_prefetch = 0 : i64, scratch_operands = 0 : i64, tpu.core_type = #tpu.core_type<tc>, window_params = [{pipeline_mode = #tpu.pipeline_mode<synchronous>, transform_indices = @transform_0, window_bounds = array<i64: 1, 128>}, {transform_indices = @transform_1, window_bounds = array<i64: 2, 128>}, {transform_indices = @transform_2, window_bounds = array<i64: 2, 32>}]} {
    %c0 = arith.constant 0 : index
    %c0_0 = arith.constant 0 : index
    %0 = vector.load %arg2[%c0, %c0_0] : memref<2x128xf32, #tpu.memory_space<vmem>>, vector<2x32xf32>
    %c0_1 = arith.constant 0 : index
    %c0_2 = arith.constant 0 : index
    %1 = vector.load %arg1[%c0_1, %c0_2] : memref<1x128xf32, #tpu.memory_space<vmem>>, vector<1x32xf32>
    %2 = vector.broadcast %1 : vector<1x32xf32> to vector<2x32xf32>
    %3 = arith.mulf %0, %2 : vector<2x32xf32>
    %c0_3 = arith.constant 0 : index
    %c32 = arith.constant 32 : index
    %4 = vector.load %arg2[%c0_3, %c32] : memref<2x128xf32, #tpu.memory_space<vmem>>, vector<2x32xf32>
    %c0_4 = arith.constant 0 : index
    %c32_5 = arith.constant 32 : index
    %5 = vector.load %arg1[%c0_4, %c32_5] : memref<1x128xf32, #tpu.memory_space<vmem>>, vector<1x32xf32>
    %6 = vector.broadcast %5 : vector<1x32xf32> to vector<2x32xf32>
    %7 = arith.mulf %4, %6 : vector<2x32xf32>
    %8 = arith.addf %3, %7 : vector<2x32xf32>
    %c0_6 = arith.constant 0 : index
    %c64 = arith.constant 64 : index
    %9 = vector.load %arg2[%c0_6, %c64] : memref<2x128xf32, #tpu.memory_space<vmem>>, vector<2x32xf32>
    %c0_7 = arith.constant 0 : index
    %c64_8 = arith.constant 64 : index
    %10 = vector.load %arg1[%c0_7, %c64_8] : memref<1x128xf32, #tpu.memory_space<vmem>>, vector<1x32xf32>
    %11 = vector.broadcast %10 : vector<1x32xf32> to vector<2x32xf32>
    %12 = arith.mulf %9, %11 : vector<2x32xf32>
    %13 = arith.addf %8, %12 : vector<2x32xf32>
    %c0_9 = arith.constant 0 : index
    %c96 = arith.constant 96 : index
    %14 = vector.load %arg2[%c0_9, %c96] : memref<2x128xf32, #tpu.memory_space<vmem>>, vector<2x32xf32>
    %c0_10 = arith.constant 0 : index
    %c96_11 = arith.constant 96 : index
    %15 = vector.load %arg1[%c0_10, %c96_11] : memref<1x128xf32, #tpu.memory_space<vmem>>, vector<1x32xf32>
    %16 = vector.broadcast %15 : vector<1x32xf32> to vector<2x32xf32>
    %17 = arith.mulf %14, %16 : vector<2x32xf32>
    %18 = arith.addf %13, %17 : vector<2x32xf32>
    %c0_12 = arith.constant 0 : index
    %c0_13 = arith.constant 0 : index
    %19 = vector.load %arg3[%c0_12, %c0_13] : memref<2x32xf32, #tpu.memory_space<vmem>>, vector<2x32xf32>
    tpu.vector_store %arg3[%c0_12, %c0_13], %18 {strides = array<i32>} : memref<2x32xf32, #tpu.memory_space<vmem>>, vector<2x32xf32>,
    return
  }
  func.func @transform_0(%arg0: i32) -> (i32, i32) {
    %c0_i32 = arith.constant 0 : i32
    %c0_i32_0 = arith.constant 0 : i32
    %c0_i32_1 = arith.constant 0 : i32
    return %c0_i32, %c0_i32_0 : i32, i32
  }
  func.func @transform_1(%arg0: i32) -> (i32, i32) {
    %c0_i32 = arith.constant 0 : i32
    %c0_i32_0 = arith.constant 0 : i32
    return %arg0, %c0_i32 : i32, i32
  }
  func.func @transform_2(%arg0: i32) -> (i32, i32) {
    %c0_i32 = arith.constant 0 : i32
    %c0_i32_0 = arith.constant 0 : i32
    return %arg0, %c0_i32 : i32, i32
  }
}

</mosaic_0001>

<llo_original>
// kernel: tpu_custom_call.1
$region0: #{tpu_custom_call.1}
  #allocation0 [shape = 'u32[]', space=smem, size = 0x4, offset = 0x4, fixed_abs, tag = 'smem constant byte address 0x4 - core index']
  #allocation1 [shape = 'u32[144,128]{1,0:T(1,128)}', space=vmem, size = 0x12000, scoped, tag = 'internal scratch']
  %s0 = inlined_call_operand.hbm [shape: f32[1,128], index: 0, kind: input, shape index: {}]
  %s1 = inlined_call_operand.vmem [shape: f32[2,128], index: 1, kind: input, shape index: {}]
  %s2 = inlined_call_operand.hbm [shape: f32[2,32], index: 2, kind: output, shape index: {}]
  %s3 = sld [smem:[#allocation0]]
  $region22: #{tpu_custom_call.1} parent=0
    _
  %s5 = ssub.s32 1, %s3
  %s6 = scalar_select 0, %s5, %s3
  $region1: #{tpu_custom_call.1} parent=0
    #allocation2 [shape = 'u8[512]{0}', space=vmem, size = 0x400, scoped, tag = 'input window, operand 0, single buffered']
    #allocation3 [shape = 's32[1]{0}', space=sflag, size = 0x4, scoped, tag = 'scoped memory for tpu_custom_call.1']
    #allocation4 [shape = 's32[1]{0}', space=sflag, size = 0x4, scoped, tag = 'scoped memory for tpu_custom_call.1']
    #allocation5 [shape = 'u8[1024]{0}', space=vmem, size = 0x400, scoped, tag = 'output window, operand 0, single buffered']
    %7 = vsyncpa [#allocation3], 0
    %8 = vsyncpa [#allocation4], 0
    // Predicated region
    $region2: #{tpu_custom_call.1} parent=1 // pred_check
      _
    $region3: #{tpu_custom_call.1} parent=1 // pred_check_branch
      %10 = sbr.rel (0) target = $region5
    $region4: #{tpu_custom_call.1} parent=1 // pred_region
      %s12 = ssub.s32 16, 16
      %13 = vsyncadd [#allocation3], %s12
      %s15 = sshll.u32 [#allocation2], 4
      %s16 = int_to_ptr.vmem [resolvable:$true] %s15
      %18 = dma.hbm_to_vmem [thread:$0]  %s0, 16, %s16, [#allocation3]
    $region5: #{tpu_custom_call.1} parent=1 // pred_fallthru
      _
    // Predicated region
    $region6: #{tpu_custom_call.1} parent=1 // pred_check
      _
    $region7: #{tpu_custom_call.1} parent=1 // pred_check_branch
      %20 = sbr.rel (0) target = $region9
    $region8: #{tpu_custom_call.1} parent=1 // pred_region
      _
    $region9: #{tpu_custom_call.1} parent=1 // pred_fallthru
      _
    // Predicated region
    $region10: #{tpu_custom_call.1} parent=1 // pred_check
      _
    $region11: #{tpu_custom_call.1} parent=1 // pred_check_branch
      %22 = sbr.rel (0) target = $region13
    $region12: #{tpu_custom_call.1} parent=1 // pred_region
      %23 = dma.done [#allocation3], 16
    $region13: #{tpu_custom_call.1} parent=1 // pred_fallthru
      _
    %v24 = vld [vmem:[%s1] sm:$0x3]
    %v25 = vld [vmem:[#allocation2] sm:$0x1]
    %v27 = vlaneseq
    %v28 = vshrl.u32 %v27, 7
    %v29 = vsub.s32 0, %v28
    %v30 = vrot.slane %v25, %v29
    %v32 = vmul.f32 %v24, %v30
    %34 = vrot.lane.b32.xlu0 %v32, 96
    %v35 = vpop.permute.xlu0 %34
    %v37 = vadd.f32 %v32, %v35
    %38 = vrot.lane.b32.xlu0 %v32, 64
    %v39 = vpop.permute.xlu0 %38
    %v41 = vadd.f32 %v37, %v39
    %42 = vrot.lane.b32.xlu0 %v32, 32
    %v43 = vpop.permute.xlu0 %42
    %v45 = vadd.f32 %v41, %v43
    %vm46 = vcmask 254976
    %47 = vst.msk [vmem:[#allocation5] sm:$0x3] %vm46, %v45
    // Predicated region
    $region14: #{tpu_custom_call.1} parent=1 // pred_check
      _
    $region15: #{tpu_custom_call.1} parent=1 // pred_check_branch
      %49 = sbr.rel (0) target = $region17
    $region16: #{tpu_custom_call.1} parent=1 // pred_region
      %s51 = ssub.s32 32, 32
      %52 = vsyncadd [#allocation4], %s51
      %s54 = sshll.u32 [#allocation5], 4
      %s55 = int_to_ptr.vmem [resolvable:$true] %s54
      %57 = dma.vmem_to_hbm [thread:$0]  %s55, 32, %s2, [#allocation4]
    $region17: #{tpu_custom_call.1} parent=1 // pred_fallthru
      _
    // Predicated region
    $region18: #{tpu_custom_call.1} parent=1 // pred_check
      _
    $region19: #{tpu_custom_call.1} parent=1 // pred_check_branch
      %59 = sbr.rel (0) target = $region21
    $region20: #{tpu_custom_call.1} parent=1 // pred_region
      %60 = dma.done [#allocation4], 32
    $region21: #{tpu_custom_call.1} parent=1 // pred_fallthru
      _
    %61 = vsyncpa [#allocation3], 1
    %62 = vsyncpa [#allocation4], 1

</llo_original>
